<compile_context>
chip_gen: v7x
topology: tpu7x:2x2x1
jax: 0.10.0
libtpu: 0.0.40
codegen_flags: <defaults>
</compile_context>

<pallas_src>
import functools

import jax
import jax.numpy as jnp
from jax import lax
from jax.experimental import pallas as pl
from jax.experimental.pallas import tpu as pltpu


def _self_attention_kernel(x_ref, wqkv_ref, o_ref):
    """Fused self-attention forward on full-array VMEM blocks.

    x_ref:    [seq, d_in]        f32
    wqkv_ref: [d_in, 3 * d_pad]  f32  (scaled W_q | W_k | W_v, each zero-padded
                                       to d_pad lanes; 1/sqrt(d_out) already
                                       folded into the W_q columns)
    o_ref:    [seq, d_pad]       f32  (only the first d_out lanes meaningful)
    """
    x = x_ref[...].astype(jnp.float32)
    w = wqkv_ref[...].astype(jnp.float32)
    d_pad = w.shape[1] // 3

    # Fused QKV projection — single MXU pass; the MXU is otherwise idle here
    # and keeping the contraction off the VPU/XLU avoids cross-lane broadcasts.
    qkv = jnp.dot(x, w, preferred_element_type=jnp.float32)

    # Slice Q/K/V at lane-aligned (multiple-of-128) boundaries.
    q = qkv[:, 0:d_pad]            # already carries the 1/sqrt(d_out) scale
    k = qkv[:, d_pad:2 * d_pad]
    v = qkv[:, 2 * d_pad:3 * d_pad]

    # scores = Q @ K^T without materializing a transpose: contract last dims.
    scores = lax.dot_general(
        q, k,
        dimension_numbers=(((1,), (1,)), ((), ())),
        preferred_element_type=jnp.float32,
    )

    # Numerically stable softmax along the key axis. Padding lanes of Q/K are
    # zero so they add nothing to the scores; no masking needed.
    m = jnp.max(scores, axis=-1, keepdims=True)
    e = jnp.exp(scores - m)
    denom = jnp.sum(e, axis=-1, keepdims=True)
    # Exact reciprocal keeps 1e-5 agreement with the reference; approx=True
    # (EUP vrcp) would likely violate that tolerance.
    attn = e * pl.reciprocal(denom, approx=False)

    # context = attn @ V  (lane-dense [seq, d_pad] output -> unmasked stores).
    ctx = jnp.dot(attn, v, preferred_element_type=jnp.float32)
    o_ref[...] = ctx.astype(o_ref.dtype)


def fuse_qkv_weights(w_query, w_key, w_value):
    """Pad each projection to a 128-lane multiple, fold 1/sqrt(d_out) into W_q,
    and concatenate into one [d_in, 3*d_pad] weight. Depends only on the
    weights — hoist out of the per-call path when weights are static."""
    d_out = w_query.shape[1]
    d_pad = 128 * pl.cdiv(d_out, 128)
    pad_cols = d_pad - d_out
    w_q_scaled = w_query * (1.0 / (d_out ** 0.5))   # softmax temperature folded in
    return jnp.concatenate(
        [jnp.pad(w, ((0, 0), (0, pad_cols)))
         for w in (w_q_scaled, w_key, w_value)],
        axis=1,
    )


def _attention_from_fused(x, w_qkv, d_out):
    seq = x.shape[0]
    d_pad = w_qkv.shape[1] // 3
    out_padded = pl.pallas_call(
        _self_attention_kernel,
        out_shape=jax.ShapeDtypeStruct((seq, d_pad), x.dtype),
        in_specs=[
            pl.BlockSpec(memory_space=pltpu.MemorySpace.VMEM),
            pl.BlockSpec(memory_space=pltpu.MemorySpace.VMEM),
        ],
        out_specs=pl.BlockSpec(memory_space=pltpu.MemorySpace.VMEM),
    )(x, w_qkv)
    # Drop the padding lanes; fused into the same XLA program by jit.
    return out_padded[:, :d_out]


@jax.jit
def self_attention_v1(x, w_query, w_key, w_value):
    """Convenience entry point: one jitted program does weight fusion,
    the pallas kernel, and the output slice."""
    d_out = w_query.shape[1]
    w_qkv = fuse_qkv_weights(w_query, w_key, w_value)
    return _attention_from_fused(x, w_qkv, d_out)


def self_attention_v1_ref(x, w_query, w_key, w_value):
    # Pure-JAX reference mirroring the PyTorch forward pass.
    keys = x @ w_key
    queries = x @ w_query
    values = x @ w_value
    attn_scores = queries @ keys.T
    attn_weights = jax.nn.softmax(attn_scores / keys.shape[-1] ** 0.5, axis=-1)
    return attn_weights @ values


if __name__ == "__main__":
    # Inputs from the reference script: 6 tokens, d_in=3.
    x = jnp.array(
        [
            [0.43, 0.15, 0.89],
            [0.55, 0.87, 0.66],
            [0.57, 0.85, 0.64],
            [0.22, 0.58, 0.33],
            [0.77, 0.25, 0.10],
            [0.05, 0.80, 0.55],
        ],
        dtype=jnp.float32,
    )

    d_in = x.shape[1]   # 3
    d_out = 4

    # Deterministic parameters (module uses torch.rand(d_in, d_out) -> uniform [0,1)).
    key = jax.random.PRNGKey(0)
    kq, kk, kv = jax.random.split(key, 3)
    w_query = jax.random.uniform(kq, (d_in, d_out), dtype=jnp.float32)
    w_key = jax.random.uniform(kk, (d_in, d_out), dtype=jnp.float32)
    w_value = jax.random.uniform(kv, (d_in, d_out), dtype=jnp.float32)

    # Single fused-dispatch path.
    out = jax.block_until_ready(self_attention_v1(x, w_query, w_key, w_value))
    ref = self_attention_v1_ref(x, w_query, w_key, w_value)

    assert out.shape == (x.shape[0], d_out)
    assert jnp.allclose(out, ref, atol=1e-5, rtol=1e-5), (out, ref)

    # Hoisted-weight path (weight fusion done once, outside the per-call path).
    w_qkv = jax.block_until_ready(jax.jit(fuse_qkv_weights)(w_query, w_key, w_value))
    apply_fn = jax.jit(functools.partial(_attention_from_fused, d_out=d_out))
    out2 = jax.block_until_ready(apply_fn(x, w_qkv))
    assert jnp.allclose(out2, ref, atol=1e-5, rtol=1e-5), (out2, ref)

    print("KERNEL_OK")
</pallas_src>

<mosaic_0001>
module attributes {stable_mosaic.version = 11 : i64} {
  func.func @_self_attention_kernel(%arg0: memref<6x3xf32, #tpu.memory_space<vmem>>, %arg1: memref<3x384xf32, #tpu.memory_space<vmem>>, %arg2: memref<6x128xf32, #tpu.memory_space<vmem>>) attributes {dimension_semantics = [], scalar_prefetch = 0 : i64, scratch_operands = 0 : i64, tpu.core_type = #tpu.core_type<tc>} {
    %c0 = arith.constant 0 : index
    %c0_0 = arith.constant 0 : index
    %0 = vector.load %arg0[%c0, %c0_0] : memref<6x3xf32, #tpu.memory_space<vmem>>, vector<6x3xf32>
    %c0_1 = arith.constant 0 : index
    %c0_2 = arith.constant 0 : index
    %1 = vector.load %arg1[%c0_1, %c0_2] : memref<3x384xf32, #tpu.memory_space<vmem>>, vector<3x384xf32>
    %cst = arith.constant dense<0.000000e+00> : vector<6x384xf32>
    %2 = tpu.matmul %0, %1, %cst {dimension_numbers = #tpu.dot_dimension_numbers<[1], [0], [0], [1], [0, 0, 1, 1], [], []>} : vector<6x3xf32>, vector<3x384xf32>, vector<6x384xf32> -> vector<6x384xf32>
    %3 = vector.extract_strided_slice %2 {offsets = [0, 0], sizes = [6, 128], strides = [1, 1]} : vector<6x384xf32> to vector<6x128xf32>
    %4 = vector.extract_strided_slice %2 {offsets = [0, 128], sizes = [6, 128], strides = [1, 1]} : vector<6x384xf32> to vector<6x128xf32>
    %5 = vector.extract_strided_slice %2 {offsets = [0, 256], sizes = [6, 128], strides = [1, 1]} : vector<6x384xf32> to vector<6x128xf32>
    %cst_3 = arith.constant dense<0.000000e+00> : vector<6x6xf32>
    %6 = tpu.matmul %3, %4, %cst_3 {dimension_numbers = #tpu.dot_dimension_numbers<[1], [1], [0], [0], [0, 0, 1, 0], [], []>} : vector<6x128xf32>, vector<6x128xf32>, vector<6x6xf32> -> vector<6x6xf32>
    %cst_4 = arith.constant dense<0xFF800000> : vector<6xf32>
    %7 = vector.multi_reduction <maximumf>, %6, %cst_4 [1] : vector<6x6xf32> to vector<6xf32>
    %8 = vector.shape_cast %7 : vector<6xf32> to vector<6x1xf32>
    %9 = vector.broadcast %8 : vector<6x1xf32> to vector<6x6xf32>
    %10 = arith.subf %6, %9 : vector<6x6xf32>
    %11 = math.exp %10 : vector<6x6xf32>
    %cst_5 = arith.constant dense<0.000000e+00> : vector<6xf32>
    %12 = vector.multi_reduction <add>, %11, %cst_5 [1] : vector<6x6xf32> to vector<6xf32>
    %13 = vector.shape_cast %12 : vector<6xf32> to vector<6x1xf32>
    %14 = tpu.reciprocal %13 : vector<6x1xf32> -> vector<6x1xf32>
    %15 = vector.broadcast %14 : vector<6x1xf32> to vector<6x6xf32>
    %16 = arith.mulf %11, %15 : vector<6x6xf32>
    %cst_6 = arith.constant dense<0.000000e+00> : vector<6x128xf32>
    %17 = tpu.matmul %16, %5, %cst_6 {dimension_numbers = #tpu.dot_dimension_numbers<[1], [0], [0], [1], [0, 0, 1, 1], [], []>} : vector<6x6xf32>, vector<6x128xf32>, vector<6x128xf32> -> vector<6x128xf32>
    %c0_7 = arith.constant 0 : index
    %c0_8 = arith.constant 0 : index
    %18 = vector.load %arg2[%c0_7, %c0_8] : memref<6x128xf32, #tpu.memory_space<vmem>>, vector<6x128xf32>
    tpu.vector_store %arg2[%c0_7, %c0_8], %17 {strides = array<i32>} : memref<6x128xf32, #tpu.memory_space<vmem>>, vector<6x128xf32>,
    return
  }
}

</mosaic_0001>

<llo_original>
// kernel: self_attention_v1.1
$region0: #{self_attention_v1.1}
  #allocation0 [shape = 'u32[]', space=smem, size = 0x4, offset = 0x4, fixed_abs, tag = 'smem constant byte address 0x4 - core index']
  #allocation1 [shape = 'u32[144,128]{1,0:T(1,128)}', space=vmem, size = 0x12000, scoped, tag = 'internal scratch']
  %s0 = inlined_call_operand.vmem [shape: f32[6,3], index: 0, kind: input, shape index: {}]
  %s1 = inlined_call_operand.vmem [shape: f32[3,384], index: 1, kind: input, shape index: {}]
  %s2 = inlined_call_operand.vmem [shape: f32[6,128], index: 2, kind: output, shape index: {}]
  %s3 = sld [smem:[#allocation0]]
  $region18: #{self_attention_v1.1} parent=0
    _
  %s5 = ssub.s32 1, %s3
  %s6 = scalar_select 0, %s5, %s3
  // Predicated region
  $region2: #{self_attention_v1.1} parent=0 // pred_check
    _
  $region3: #{self_attention_v1.1} parent=0 // pred_check_branch
    %8 = sbr.rel (0) target = $region5
  $region4: #{self_attention_v1.1} parent=0 // pred_region
    _
  $region5: #{self_attention_v1.1} parent=0 // pred_fallthru
    _
  // Predicated region
  $region6: #{self_attention_v1.1} parent=0 // pred_check
    _
  $region7: #{self_attention_v1.1} parent=0 // pred_check_branch
    %10 = sbr.rel (0) target = $region9
  $region8: #{self_attention_v1.1} parent=0 // pred_region
    _
  $region9: #{self_attention_v1.1} parent=0 // pred_fallthru
    _
  %v11 = vld [vmem:[%s0] sm:$0x3f]
  %v12 = vld [vmem:[%s1] sm:$0x77]
  %v13 = vld [vmem:[%s1 + $0x8] sm:$0x7]
  %v16 = vcombine.high %v12, %v12
  %vm17 = vcmask 23552
  %v19 = vsel %vm17, %v11, 0
  %vm21 = vcmask 1042432
  %v22 = vsel %vm21, %v12, 0
  %v24 = vsel %vm21, %v16, 0
  %v26 = vsel %vm21, %v13, 0
  %28 = vmatprep.subr.mxu0 %v24
  %29 = vmatpush1.msra.mxu0 %v22
  %30 = vmatprep.subr.mxu0 0.0
  %31 = vmatpush1.msra.mxu0 0.0
  %32 = vmatprep.subr.mxu0 0.0
  %33 = vmatpush1.msra.mxu0 0.0
  %34 = vmatprep.subr.mxu0 0.0
  %35 = vmatpush1.msra.mxu0 0.0
  %36 = vmatprep.subr.mxu0 0.0
  %37 = vmatpush1.msra.mxu0 0.0
  %38 = vmatprep.subr.mxu0 0.0
  %39 = vmatpush1.msra.mxu0 0.0
  %40 = vmatprep.subr.mxu0 0.0
  %41 = vmatpush1.msra.mxu0 0.0
  %42 = vmatprep.subr.mxu0 0.0
  %43 = vmatpush1.msra.mxu0 0.0
  %44 = vmatprep.subr.mxu0 0.0
  %45 = vmatpush1.msra.mxu0 0.0
  %46 = vmatprep.subr.mxu0 0.0
  %47 = vmatpush1.msra.mxu0 0.0
  %48 = vmatprep.subr.mxu0 0.0
  %49 = vmatpush1.msra.mxu0 0.0
  %50 = vmatprep.subr.mxu0 0.0
  %51 = vmatpush1.msra.mxu0 0.0
  %52 = vmatprep.subr.mxu0 0.0
  %53 = vmatpush1.msra.mxu0 0.0
  %54 = vmatprep.subr.mxu0 0.0
  %55 = vmatpush1.msra.mxu0 0.0
  %56 = vmatprep.subr.mxu0 0.0
  %57 = vmatpush1.msra.mxu0 0.0
  %58 = vmatprep.subr.mxu0 0.0
  %59 = vmatpush1.msra.mxu0 0.0
  %60 = vmatprep.subr.mxu0 0.0
  %61 = vmatpush1.msra.mxu0 0.0
  %62 = vmatprep.subr.mxu0 0.0
  %63 = vmatpush1.msra.mxu0 0.0
  %64 = vmatprep.subr.mxu0 0.0
  %65 = vmatpush1.msra.mxu0 0.0
  %66 = vmatprep.subr.mxu0 0.0
  %67 = vmatpush1.msra.mxu0 0.0
  %68 = vmatprep.subr.mxu0 0.0
  %69 = vmatpush1.msra.mxu0 0.0
  %70 = vmatprep.subr.mxu0 0.0
  %71 = vmatpush1.msra.mxu0 0.0
  %72 = vmatprep.subr.mxu0 0.0
  %73 = vmatpush1.msra.mxu0 0.0
  %74 = vmatprep.subr.mxu0 0.0
  %75 = vmatpush1.msra.mxu0 0.0
  %76 = vmatprep.subr.mxu0 0.0
  %77 = vmatpush1.msra.mxu0 0.0
  %78 = vmatprep.subr.mxu0 0.0
  %79 = vmatpush1.msra.mxu0 0.0
  %80 = vmatprep.subr.mxu0 0.0
  %81 = vmatpush1.msra.mxu0 0.0
  %82 = vmatprep.subr.mxu0 0.0
  %83 = vmatpush1.msra.mxu0 0.0
  %84 = vmatprep.subr.mxu0 0.0
  %85 = vmatpush1.msra.mxu0 0.0
  %86 = vmatprep.subr.mxu0 0.0
  %87 = vmatpush1.msra.mxu0 0.0
  %88 = vmatprep.subr.mxu0 0.0
  %89 = vmatpush1.msra.mxu0 0.0
  %90 = vmatprep.subr.mxu0 0.0
  %91 = vmatpush1.msra.mxu0 0.0
  %92 = vmatprep.mubr.f32.mxu0 0.0
  %93 = vmatmul.mubr.f32.gmra.mrb[0].mxu0 %v19
  %v94 = vpop.f32.mrb[0].mxu0
  %v95 = vadd.f32 0.0, %v94
  %v96 = vpop.f32.mrb[0].mxu0
  %v97 = vadd.f32 0.0, %v96
  %98 = vdwg.mxu0
  %99 = vmatprep.subr.mxu0 0.0
  %100 = vmatpush1.msra.mxu0 %v26
  %101 = vmatprep.subr.mxu0 0.0
  %102 = vmatpush1.msra.mxu0 0.0
  %103 = vmatprep.subr.mxu0 0.0
  %104 = vmatpush1.msra.mxu0 0.0
  %105 = vmatprep.subr.mxu0 0.0
  %106 = vmatpush1.msra.mxu0 0.0
  %107 = vmatprep.subr.mxu0 0.0
  %108 = vmatpush1.msra.mxu0 0.0
  %109 = vmatprep.subr.mxu0 0.0
  %110 = vmatpush1.msra.mxu0 0.0
  %111 = vmatprep.subr.mxu0 0.0
  %112 = vmatpush1.msra.mxu0 0.0
  %113 = vmatprep.subr.mxu0 0.0
  %114 = vmatpush1.msra.mxu0 0.0
  %115 = vmatprep.subr.mxu0 0.0
  %116 = vmatpush1.msra.mxu0 0.0
  %117 = vmatprep.subr.mxu0 0.0
  %118 = vmatpush1.msra.mxu0 0.0
  %119 = vmatprep.subr.mxu0 0.0
  %120 = vmatpush1.msra.mxu0 0.0
  %121 = vmatprep.subr.mxu0 0.0
  %122 = vmatpush1.msra.mxu0 0.0
  %123 = vmatprep.subr.mxu0 0.0
  %124 = vmatpush1.msra.mxu0 0.0
  %125 = vmatprep.subr.mxu0 0.0
  %126 = vmatpush1.msra.mxu0 0.0
  %127 = vmatprep.subr.mxu0 0.0
  %128 = vmatpush1.msra.mxu0 0.0
  %129 = vmatprep.subr.mxu0 0.0
  %130 = vmatpush1.msra.mxu0 0.0
  %131 = vmatprep.subr.mxu0 0.0
  %132 = vmatpush1.msra.mxu0 0.0
  %133 = vmatprep.subr.mxu0 0.0
  %134 = vmatpush1.msra.mxu0 0.0
  %135 = vmatprep.subr.mxu0 0.0
  %136 = vmatpush1.msra.mxu0 0.0
  %137 = vmatprep.subr.mxu0 0.0
  %138 = vmatpush1.msra.mxu0 0.0
  %139 = vmatprep.subr.mxu0 0.0
  %140 = vmatpush1.msra.mxu0 0.0
  %141 = vmatprep.subr.mxu0 0.0
  %142 = vmatpush1.msra.mxu0 0.0
  %143 = vmatprep.subr.mxu0 0.0
  %144 = vmatpush1.msra.mxu0 0.0
  %145 = vmatprep.subr.mxu0 0.0
  %146 = vmatpush1.msra.mxu0 0.0
  %147 = vmatprep.subr.mxu0 0.0
  %148 = vmatpush1.msra.mxu0 0.0
  %149 = vmatprep.subr.mxu0 0.0
  %150 = vmatpush1.msra.mxu0 0.0
  %151 = vmatprep.subr.mxu0 0.0
  %152 = vmatpush1.msra.mxu0 0.0
  %153 = vmatprep.subr.mxu0 0.0
  %154 = vmatpush1.msra.mxu0 0.0
  %155 = vmatprep.subr.mxu0 0.0
  %156 = vmatpush1.msra.mxu0 0.0
  %157 = vmatprep.subr.mxu0 0.0
  %158 = vmatpush1.msra.mxu0 0.0
  %159 = vmatprep.subr.mxu0 0.0
  %160 = vmatpush1.msra.mxu0 0.0
  %161 = vmatprep.subr.mxu0 0.0
  %162 = vmatpush1.msra.mxu0 0.0
  %163 = vmatprep.mubr.f32.mxu0 0.0
  %164 = vmatmul.mubr.f32.gmra.mrb[0].mxu0 %v19
  %v165 = vpop.f32.mrb[0].mxu0
  %v166 = vadd.f32 0.0, %v165
  %v167 = vpop.f32.mrb[0].mxu0
  %168 = vdwg.mxu0
  %169 = vmatprep.subr.mxu0 0.0
  %170 = vmatpush1.xpose.msra.mxu0 %v97
  %171 = vmatprep.subr.mxu0 0.0
  %172 = vmatpush1.xpose.msra.mxu0 0.0
  %173 = vmatprep.subr.mxu0 0.0
  %174 = vmatpush1.xpose.msra.mxu0 0.0
  %175 = vmatprep.subr.mxu0 0.0
  %176 = vmatpush1.xpose.msra.mxu0 0.0
  %177 = vmatprep.subr.mxu0 0.0
  %178 = vmatpush1.xpose.msra.mxu0 0.0
  %179 = vmatprep.subr.mxu0 0.0
  %180 = vmatpush1.xpose.msra.mxu0 0.0
  %181 = vmatprep.subr.mxu0 0.0
  %182 = vmatpush1.xpose.msra.mxu0 0.0
  %183 = vmatprep.subr.mxu0 0.0
  %184 = vmatpush1.xpose.msra.mxu0 0.0
  %185 = vmatprep.subr.mxu0 0.0
  %186 = vmatpush1.xpose.msra.mxu0 0.0
  %187 = vmatprep.subr.mxu0 0.0
  %188 = vmatpush1.xpose.msra.mxu0 0.0
  %189 = vmatprep.subr.mxu0 0.0
  %190 = vmatpush1.xpose.msra.mxu0 0.0
  %191 = vmatprep.subr.mxu0 0.0
  %192 = vmatpush1.xpose.msra.mxu0 0.0
  %193 = vmatprep.subr.mxu0 0.0
  %194 = vmatpush1.xpose.msra.mxu0 0.0
  %195 = vmatprep.subr.mxu0 0.0
  %196 = vmatpush1.xpose.msra.mxu0 0.0
  %197 = vmatprep.subr.mxu0 0.0
  %198 = vmatpush1.xpose.msra.mxu0 0.0
  %199 = vmatprep.subr.mxu0 0.0
  %200 = vmatpush1.xpose.msra.mxu0 0.0
  %201 = vmatprep.subr.mxu0 0.0
  %202 = vmatpush1.xpose.msra.mxu0 0.0
  %203 = vmatprep.subr.mxu0 0.0
  %204 = vmatpush1.xpose.msra.mxu0 0.0
  %205 = vmatprep.subr.mxu0 0.0
  %206 = vmatpush1.xpose.msra.mxu0 0.0
  %207 = vmatprep.subr.mxu0 0.0
  %208 = vmatpush1.xpose.msra.mxu0 0.0
  %209 = vmatprep.subr.mxu0 0.0
  %210 = vmatpush1.xpose.msra.mxu0 0.0
  %211 = vmatprep.subr.mxu0 0.0
  %212 = vmatpush1.xpose.msra.mxu0 0.0
  %213 = vmatprep.subr.mxu0 0.0
  %214 = vmatpush1.xpose.msra.mxu0 0.0
  %215 = vmatprep.subr.mxu0 0.0
  %216 = vmatpush1.xpose.msra.mxu0 0.0
  %217 = vmatprep.subr.mxu0 0.0
  %218 = vmatpush1.xpose.msra.mxu0 0.0
  %219 = vmatprep.subr.mxu0 0.0
  %220 = vmatpush1.xpose.msra.mxu0 0.0
  %221 = vmatprep.subr.mxu0 0.0
  %222 = vmatpush1.xpose.msra.mxu0 0.0
  %223 = vmatprep.subr.mxu0 0.0
  %224 = vmatpush1.xpose.msra.mxu0 0.0
  %225 = vmatprep.subr.mxu0 0.0
  %226 = vmatpush1.xpose.msra.mxu0 0.0
  %227 = vmatprep.subr.mxu0 0.0
  %228 = vmatpush1.xpose.msra.mxu0 0.0
  %229 = vmatprep.subr.mxu0 0.0
  %230 = vmatpush1.xpose.msra.mxu0 0.0
  %231 = vmatprep.subr.mxu0 0.0
  %232 = vmatpush1.xpose.msra.mxu0 0.0
  %233 = vmatprep.mubr.f32.mxu0 0.0
  %234 = vmatmul.mubr.f32.gmra.mrb[0].mxu0 %v95
  %v235 = vpop.f32.mrb[0].mxu0
  %v236 = vadd.f32 0.0, %v235
  %v237 = vpop.f32.mrb[0].mxu0
  %238 = vdwg.mxu0
  %vm239 = vcmask 46080
  %v240 = vsel %vm239, %v236, -inf
  %241 = vmax.xlane.f32.xlu0 %v240
  %v242 = vpop.xlane.xlu0 %241
  %v243 = vsub.f32 %v236, %v242
  %v244 = vmul.f32 %v243, 1.442695
  %v245 = vpow.pop %v244
  %v246 = vsel %vm239, %v245, 0.0
  %247 = vadd.xlane.f32.xlu0 %v246
  %v248 = vpop.xlane.xlu0 %247
  %v249 = vrcp.pop %v248
  %v250 = vmul.f32 %v245, %v249
  %vm251 = vcmask 48128
  %v253 = vsel %vm251, %v250, 0
  %vm255 = vcmask 1045504
  %v257 = vsel %vm255, %v166, 0
  %259 = vmatprep.subr.mxu0 0.0
  %260 = vmatpush1.msra.mxu0 %v257
  %261 = vmatprep.subr.mxu0 0.0
  %262 = vmatpush1.msra.mxu0 0.0
  %263 = vmatprep.subr.mxu0 0.0
  %264 = vmatpush1.msra.mxu0 0.0
  %265 = vmatprep.subr.mxu0 0.0
  %266 = vmatpush1.msra.mxu0 0.0
  %267 = vmatprep.subr.mxu0 0.0
  %268 = vmatpush1.msra.mxu0 0.0
  %269 = vmatprep.subr.mxu0 0.0
  %270 = vmatpush1.msra.mxu0 0.0
  %271 = vmatprep.subr.mxu0 0.0
  %272 = vmatpush1.msra.mxu0 0.0
  %273 = vmatprep.subr.mxu0 0.0
  %274 = vmatpush1.msra.mxu0 0.0
  %275 = vmatprep.subr.mxu0 0.0
  %276 = vmatpush1.msra.mxu0 0.0
  %277 = vmatprep.subr.mxu0 0.0
  %278 = vmatpush1.msra.mxu0 0.0
  %279 = vmatprep.subr.mxu0 0.0
  %280 = vmatpush1.msra.mxu0 0.0
  %281 = vmatprep.subr.mxu0 0.0
  %282 = vmatpush1.msra.mxu0 0.0
  %283 = vmatprep.subr.mxu0 0.0
  %284 = vmatpush1.msra.mxu0 0.0
  %285 = vmatprep.subr.mxu0 0.0
  %286 = vmatpush1.msra.mxu0 0.0
  %287 = vmatprep.subr.mxu0 0.0
  %288 = vmatpush1.msra.mxu0 0.0
  %289 = vmatprep.subr.mxu0 0.0
  %290 = vmatpush1.msra.mxu0 0.0
  %291 = vmatprep.subr.mxu0 0.0
  %292 = vmatpush1.msra.mxu0 0.0
  %293 = vmatprep.subr.mxu0 0.0
  %294 = vmatpush1.msra.mxu0 0.0
  %295 = vmatprep.subr.mxu0 0.0
  %296 = vmatpush1.msra.mxu0 0.0
  %297 = vmatprep.subr.mxu0 0.0
  %298 = vmatpush1.msra.mxu0 0.0
  %299 = vmatprep.subr.mxu0 0.0
  %300 = vmatpush1.msra.mxu0 0.0
  %301 = vmatprep.subr.mxu0 0.0
  %302 = vmatpush1.msra.mxu0 0.0
  %303 = vmatprep.subr.mxu0 0.0
  %304 = vmatpush1.msra.mxu0 0.0
  %305 = vmatprep.subr.mxu0 0.0
  %306 = vmatpush1.msra.mxu0 0.0
  %307 = vmatprep.subr.mxu0 0.0
  %308 = vmatpush1.msra.mxu0 0.0
  %309 = vmatprep.subr.mxu0 0.0
  %310 = vmatpush1.msra.mxu0 0.0
  %311 = vmatprep.subr.mxu0 0.0
  %312 = vmatpush1.msra.mxu0 0.0
  %313 = vmatprep.subr.mxu0 0.0
  %314 = vmatpush1.msra.mxu0 0.0
  %315 = vmatprep.subr.mxu0 0.0
  %316 = vmatpush1.msra.mxu0 0.0
  %317 = vmatprep.subr.mxu0 0.0
  %318 = vmatpush1.msra.mxu0 0.0
  %319 = vmatprep.subr.mxu0 0.0
  %320 = vmatpush1.msra.mxu0 0.0
  %321 = vmatprep.subr.mxu0 0.0
  %322 = vmatpush1.msra.mxu0 0.0
  %323 = vmatprep.mubr.f32.mxu0 0.0
  %324 = vmatmul.mubr.f32.gmra.mrb[0].mxu0 %v253
  %v325 = vpop.f32.mrb[0].mxu0
  %v326 = vadd.f32 0.0, %v325
  %v327 = vpop.f32.mrb[0].mxu0
  %328 = vdwg.mxu0
  %329 = vst [vmem:[%s2] sm:$0x3f] %v326
  // Predicated region
  $region10: #{self_attention_v1.1} parent=0 // pred_check
    _
  $region11: #{self_attention_v1.1} parent=0 // pred_check_branch
    %331 = sbr.rel (0) target = $region13
  $region12: #{self_attention_v1.1} parent=0 // pred_region
    _
  $region13: #{self_attention_v1.1} parent=0 // pred_fallthru
    _
  // Predicated region
  $region14: #{self_attention_v1.1} parent=0 // pred_check
    _
  $region15: #{self_attention_v1.1} parent=0 // pred_check_branch
    %333 = sbr.rel (0) target = $region17
  $region16: #{self_attention_v1.1} parent=0 // pred_region
    _
  $region17: #{self_attention_v1.1} parent=0 // pred_fallthru
    _

</llo_original>
